<compile_context>
chip_gen: v7x
topology: tpu7x:2x2x1
jax: 0.10.0
libtpu: 0.0.40
codegen_flags: <defaults>
</compile_context>

<pallas_src>
import functools

import numpy as np

import jax
import jax.numpy as jnp
from jax.experimental import pallas as pl
from jax.experimental.pallas import tpu as pltpu


# ----------------------------- Pallas kernel ------------------------------- #
def _shuffle_plug6_kernel(x_ref, xg_ref, m12_ref, b12_ref, tab_ref, m9_ref,
                          o_ref, *, S, NC):
    f32 = jnp.float32
    P = S * S

    tab = tab_ref[...]                    # (2*NC, 13) per-row parameters
    # tab columns: 0 sa (branch1 BN scale or 0), 1 sb (branch2 BN scale or 0),
    #              2 BN shift, 3 cadd (= s3*b3 + t3, valid in rows < NC),
    #              4..12 BN3-folded 3x3 tap coefficients.

    # ---- both 1x1-conv branches: one fused lane-dense MXU matmul -----------
    ab = jnp.dot(xg_ref[...], m12_ref[...],
                 preferred_element_type=f32) + b12_ref[...]
    # split at the lane-256 boundary (vreg aligned); branch select + folded
    # BN1/BN2 as two FMAs per row (no compare / select).
    planes = ab[:, :P] * tab[:, 0:1] + ab[:, P:] * tab[:, 1:2] + tab[:, 2:3]

    # ---- grouped, channel-shuffled 3x3 conv via lane rolls -----------------
    # boundary masks are host-precomputed (m9_ref); accumulator starts at the
    # center tap so there is no zero materialization + extra add.
    acc = tab[:, 8:9] * planes            # center tap (di = dj = 0) -> col 8
    for t in range(9):
        di, dj = t // 3 - 1, t % 3 - 1
        if di == 0 and dj == 0:
            continue
        off = di * S + dj
        src = pltpu.roll(planes, shift=(-off) % P, axis=1)
        acc = acc + tab[:, 4 + t:5 + t] * (src * m9_ref[t:t + 1, :])

    # ---- BN3 (folded) + bias + residual shortcut + exact GELU --------------
    z = x_ref[...] + tab[:NC, 3:4] + acc[:NC, :] + acc[NC:, :]
    inv_sqrt2 = 0.7071067811865476
    o_ref[...] = 0.5 * z * (1.0 + jax.lax.erf(z * inv_sqrt2))


# ------------------------------ JAX glue ------------------------------------ #
def _fold_bn(bn, eps=1e-5):
    gamma, beta, mean, var = bn
    scale = gamma / jnp.sqrt(var + eps)
    shift = beta - mean * scale
    return scale, shift


def make_shuffle_plug_6(w1, b1, w2, b2, k3, b3, bn1, bn2, bn3, *, N, C, S,
                        weights_bf16=False):
    """One-time weight/structure prep; returns a jitted apply(x)."""
    f32 = jnp.float32
    P = S * S
    NC = N * C

    s1, t1 = _fold_bn(bn1)
    s2, t2 = _fold_bn(bn2)
    s3, t3 = _fold_bn(bn3)

    # structured (P, 2P) matrix: one fused matmul produces both flattened
    # branch planes directly in the lane-dense layout.
    eye = jnp.eye(S, dtype=f32)
    mat1 = jnp.kron(eye, w1.astype(f32).T)          # M1[i*S+h, i*S+j] = W1[j,h]
    mat2 = jnp.kron(w2.astype(f32).T, eye)          # M2[w*S+j, i*S+j] = W2[i,w]
    mat12 = jnp.concatenate([mat1, mat2], axis=1)   # (P, 2P)
    b1f = jnp.tile(b1.astype(f32), S)               # b1f[i*S+j] = b1[j]
    b2f = jnp.repeat(b2.astype(f32), S)             # b2f[i*S+j] = b2[i]
    b12 = jnp.concatenate([b1f, b2f]).reshape(1, 2 * P)
    if weights_bf16:
        # Halves the 512 KiB weight DMA; re-validate tolerance before using.
        mat12 = mat12.astype(jnp.bfloat16)

    # static channel-shuffle / conv3 grouping: output channel o reads the two
    # shuffled channels 2o, 2o+1, i.e. concat channel 2*((2o+p)%C) + (2o+p)//C
    o_of = np.tile(np.arange(C), N)                 # output channel per row
    src_branch = np.zeros((2, NC), np.int32)        # 0 -> branch1, 1 -> branch2
    src_row = np.zeros((2, NC), np.int32)           # x_flat row feeding plane
    for r in range(NC):
        n, o = divmod(r, C)
        for p_ in range(2):
            cprime = 2 * o + p_
            cc = 2 * (cprime % C) + cprime // C
            br = 0 if cc < C else 1
            u = cc if br == 0 else cc - C
            src_branch[p_, r] = br
            src_row[p_, r] = n * C + u

    gather = jnp.asarray(np.concatenate([src_row[0], src_row[1]]))   # (2*NC,)

    br = np.concatenate([src_branch[0], src_branch[1]])              # (2*NC,)
    u = np.concatenate([src_row[0] % C, src_row[1] % C])             # src chan
    is_b1 = jnp.asarray(br) == 0
    s_sel = jnp.where(is_b1, s1[u], s2[u]).astype(f32)
    t_sel = jnp.where(is_b1, t1[u], t2[u]).astype(f32)
    sa = jnp.where(is_b1, s_sel, 0.0)                # branch1 scale (else 0)
    sb = jnp.where(is_b1, 0.0, s_sel)                # branch2 scale (else 0)

    cadd = ((s3 * b3 + t3)[o_of]).astype(f32)                        # (NC,)
    cadd_full = jnp.concatenate([cadd, jnp.zeros((NC,), f32)])

    # BN3 scale folded into the 3x3 tap coefficients.
    k_sc = (k3.astype(f32) * s3[:, None, None, None]).reshape(C, 2, 9)
    ktap = jnp.concatenate([k_sc[o_of, 0, :], k_sc[o_of, 1, :]], axis=0)

    tab = jnp.concatenate(
        [sa[:, None], sb[:, None], t_sel[:, None], cadd_full[:, None], ktap],
        axis=1).astype(f32)                                          # (2*NC, 13)

    # host-precomputed boundary masks for the 9 taps (center row = all ones).
    pos = np.arange(P)
    ii, jj = pos // S, pos % S
    masks = np.ones((9, P), np.float32)
    for t in range(9):
        di, dj = t // 3 - 1, t % 3 - 1
        m = np.ones(P, bool)
        if di == -1:
            m &= ii >= 1
        if di == 1:
            m &= ii <= S - 2
        if dj == -1:
            m &= jj >= 1
        if dj == 1:
            m &= jj <= S - 2
        masks[t] = m
    masks9 = jnp.asarray(masks)

    kernel = functools.partial(_shuffle_plug6_kernel, S=S, NC=NC)
    call = pl.pallas_call(
        kernel,
        out_shape=jax.ShapeDtypeStruct((NC, P), f32),
        grid=(1,),
        in_specs=[
            pl.BlockSpec((NC, P), lambda i: (0, 0)),        # x (residual)
            pl.BlockSpec((2 * NC, P), lambda i: (0, 0)),    # gathered sources
            pl.BlockSpec((P, 2 * P), lambda i: (0, 0)),     # [kron(I,W1^T)|kron(W2^T,I)]
            pl.BlockSpec((1, 2 * P), lambda i: (0, 0)),     # fused bias row
            pl.BlockSpec((2 * NC, 13), lambda i: (0, 0)),   # per-row param table
            pl.BlockSpec((9, P), lambda i: (0, 0)),         # tap boundary masks
        ],
        out_specs=pl.BlockSpec((NC, P), lambda i: (0, 0)),
        compiler_params=pltpu.CompilerParams(
            dimension_semantics=("arbitrary",)),
    )

    @jax.jit
    def apply(x):
        # per-call path: reshape + static row gather + one pallas_call.
        x_flat = x.reshape(NC, P).astype(f32)
        xg = x_flat[gather]
        if weights_bf16:
            xg = xg.astype(jnp.bfloat16)
        out = call(x_flat, xg, mat12, b12, tab, masks9)
        return out.reshape(N, C, S, S)

    return apply


# ----------------------- pure-JAX reference (for check) --------------------- #
def shuffle_plug_6_ref(x, w1, b1, w2, b2, k3, b3, bn1, bn2, bn3):
    N, C, S, _ = x.shape
    s1, t1 = _fold_bn(bn1)
    s2, t2 = _fold_bn(bn2)
    s3, t3 = _fold_bn(bn3)
    o1 = jnp.einsum('ncwh,oh->ncwo', x, w1) + b1[None, None, None, :]
    o1 = o1 * s1[None, :, None, None] + t1[None, :, None, None]
    o2 = jnp.einsum('ncwh,ow->ncoh', x, w2) + b2[None, None, :, None]
    o2 = o2 * s2[None, :, None, None] + t2[None, :, None, None]
    cat = jnp.concatenate([o1, o2], axis=1)                      # (N, 2C, S, S)
    shuf = cat.reshape(N, C, 2, S, S).transpose(0, 2, 1, 3, 4).reshape(
        N, 2 * C, S, S)
    z = jax.lax.conv_general_dilated(
        shuf, k3, window_strides=(1, 1), padding=((1, 1), (1, 1)),
        feature_group_count=C, dimension_numbers=('NCHW', 'OIHW', 'NCHW'))
    z = z + b3[None, :, None, None]
    z = z * s3[None, :, None, None] + t3[None, :, None, None] + x
    return 0.5 * z * (1.0 + jax.lax.erf(z * 0.7071067811865476))


# --------------------------------- main -------------------------------------- #
if __name__ == "__main__":
    # shapes: bn_ch = C = 4, in_ch1 = out_ch1 = S = 16, x is (N, C, S, S)
    N, C, S = 2, 4, 16
    key = jax.random.PRNGKey(0)
    keys = jax.random.split(key, 10)

    x = jax.random.normal(keys[0], (N, C, S, S), jnp.float32)
    w1 = jax.random.normal(keys[1], (S, S), jnp.float32) * 0.2   # conv1.weight[:, :, 0, 0]
    b1 = jax.random.normal(keys[2], (S,), jnp.float32) * 0.1
    w2 = jax.random.normal(keys[3], (S, S), jnp.float32) * 0.2   # conv2.weight[:, :, 0, 0]
    b2 = jax.random.normal(keys[4], (S,), jnp.float32) * 0.1
    k3 = jax.random.normal(keys[5], (C, 2, 3, 3), jnp.float32) * 0.2  # conv3 grouped weight
    b3 = jax.random.normal(keys[6], (C,), jnp.float32) * 0.1

    def bn_params(k):
        kk = jax.random.split(k, 4)
        gamma = 1.0 + 0.1 * jax.random.normal(kk[0], (C,), jnp.float32)
        beta = 0.1 * jax.random.normal(kk[1], (C,), jnp.float32)
        mean = 0.1 * jax.random.normal(kk[2], (C,), jnp.float32)
        var = 1.0 + 0.1 * jax.random.uniform(kk[3], (C,), jnp.float32)
        return gamma, beta, mean, var

    bn1 = bn_params(keys[7])
    bn2 = bn_params(keys[8])
    bn3 = bn_params(keys[9])

    # one-time weight prep (hoisted out of the per-call path), jitted apply
    apply_fn = make_shuffle_plug_6(w1, b1, w2, b2, k3, b3, bn1, bn2, bn3,
                                   N=N, C=C, S=S)
    out = jax.block_until_ready(apply_fn(x))

    ref = shuffle_plug_6_ref(x, w1, b1, w2, b2, k3, b3, bn1, bn2, bn3)
    assert out.shape == (N, C, S, S)
    err = float(jnp.max(jnp.abs(out - ref)))
    if err < 2e-3:
        print("KERNEL_OK")
    else:
        print("max abs error too large:", err)
</pallas_src>

<mosaic_0001>
module attributes {stable_mosaic.version = 11 : i64} {
  func.func @_shuffle_plug6_kernel(%arg0: i32, %arg1: memref<8x256xf32, #tpu.memory_space<vmem>>, %arg2: memref<16x256xf32, #tpu.memory_space<vmem>>, %arg3: memref<256x512xf32, #tpu.memory_space<vmem>>, %arg4: memref<1x512xf32, #tpu.memory_space<vmem>>, %arg5: memref<16x13xf32, #tpu.memory_space<vmem>>, %arg6: memref<9x256xf32, #tpu.memory_space<vmem>>, %arg7: memref<8x256xf32, #tpu.memory_space<vmem>>) attributes {dimension_semantics = [#tpu.dimension_semantics<arbitrary>], iteration_bounds = array<i64: 1>, scalar_prefetch = 0 : i64, scratch_operands = 0 : i64, tpu.core_type = #tpu.core_type<tc>, window_params = [{pipeline_mode = #tpu.pipeline_mode<synchronous>, transform_indices = @transform_0, window_bounds = array<i64: 8, 256>}, {pipeline_mode = #tpu.pipeline_mode<synchronous>, transform_indices = @transform_1, window_bounds = array<i64: 16, 256>}, {pipeline_mode = #tpu.pipeline_mode<synchronous>, transform_indices = @transform_2, window_bounds = array<i64: 256, 512>}, {pipeline_mode = #tpu.pipeline_mode<synchronous>, transform_indices = @transform_3, window_bounds = array<i64: 1, 512>}, {pipeline_mode = #tpu.pipeline_mode<synchronous>, transform_indices = @transform_4, window_bounds = array<i64: 16, 13>}, {pipeline_mode = #tpu.pipeline_mode<synchronous>, transform_indices = @transform_5, window_bounds = array<i64: 9, 256>}, {pipeline_mode = #tpu.pipeline_mode<synchronous>, transform_indices = @transform_6, window_bounds = array<i64: 8, 256>}]} {
    %c0 = arith.constant 0 : index
    %c0_0 = arith.constant 0 : index
    %0 = vector.load %arg5[%c0, %c0_0] : memref<16x13xf32, #tpu.memory_space<vmem>>, vector<16x13xf32>
    %c0_1 = arith.constant 0 : index
    %c0_2 = arith.constant 0 : index
    %1 = vector.load %arg2[%c0_1, %c0_2] : memref<16x256xf32, #tpu.memory_space<vmem>>, vector<16x256xf32>
    %c0_3 = arith.constant 0 : index
    %c0_4 = arith.constant 0 : index
    %2 = vector.load %arg3[%c0_3, %c0_4] : memref<256x512xf32, #tpu.memory_space<vmem>>, vector<256x512xf32>
    %cst = arith.constant dense<0.000000e+00> : vector<16x512xf32>
    %3 = tpu.matmul %1, %2, %cst {dimension_numbers = #tpu.dot_dimension_numbers<[1], [0], [0], [1], [0, 0, 1, 1], [], []>} : vector<16x256xf32>, vector<256x512xf32>, vector<16x512xf32> -> vector<16x512xf32>
    %c0_5 = arith.constant 0 : index
    %c0_6 = arith.constant 0 : index
    %4 = vector.load %arg4[%c0_5, %c0_6] : memref<1x512xf32, #tpu.memory_space<vmem>>, vector<1x512xf32>
    %5 = vector.broadcast %4 : vector<1x512xf32> to vector<16x512xf32>
    %6 = arith.addf %3, %5 : vector<16x512xf32>
    %7 = vector.extract_strided_slice %6 {offsets = [0, 0], sizes = [16, 256], strides = [1, 1]} : vector<16x512xf32> to vector<16x256xf32>
    %8 = vector.extract_strided_slice %0 {offsets = [0, 0], sizes = [16, 1], strides = [1, 1]} : vector<16x13xf32> to vector<16x1xf32>
    %9 = vector.broadcast %8 : vector<16x1xf32> to vector<16x256xf32>
    %10 = arith.mulf %7, %9 : vector<16x256xf32>
    %11 = vector.extract_strided_slice %6 {offsets = [0, 256], sizes = [16, 256], strides = [1, 1]} : vector<16x512xf32> to vector<16x256xf32>
    %12 = vector.extract_strided_slice %0 {offsets = [0, 1], sizes = [16, 1], strides = [1, 1]} : vector<16x13xf32> to vector<16x1xf32>
    %13 = vector.broadcast %12 : vector<16x1xf32> to vector<16x256xf32>
    %14 = arith.mulf %11, %13 : vector<16x256xf32>
    %15 = arith.addf %10, %14 : vector<16x256xf32>
    %16 = vector.extract_strided_slice %0 {offsets = [0, 2], sizes = [16, 1], strides = [1, 1]} : vector<16x13xf32> to vector<16x1xf32>
    %17 = vector.broadcast %16 : vector<16x1xf32> to vector<16x256xf32>
    %18 = arith.addf %15, %17 : vector<16x256xf32>
    %19 = vector.extract_strided_slice %0 {offsets = [0, 8], sizes = [16, 1], strides = [1, 1]} : vector<16x13xf32> to vector<16x1xf32>
    %20 = vector.broadcast %19 : vector<16x1xf32> to vector<16x256xf32>
    %21 = arith.mulf %20, %18 : vector<16x256xf32>
    %c17_i32 = arith.constant 17 : i32
    %22 = tpu.dynamic_rotate %18 by %c17_i32 dim 1 : vector<16x256xf32>, i32 -> vector<16x256xf32>
    %23 = vector.extract_strided_slice %0 {offsets = [0, 4], sizes = [16, 1], strides = [1, 1]} : vector<16x13xf32> to vector<16x1xf32>
    %c0_7 = arith.constant 0 : index
    %c0_8 = arith.constant 0 : index
    %24 = vector.load %arg6[%c0_7, %c0_8] : memref<9x256xf32, #tpu.memory_space<vmem>>, vector<1x256xf32>
    %25 = vector.broadcast %24 : vector<1x256xf32> to vector<16x256xf32>
    %26 = arith.mulf %22, %25 : vector<16x256xf32>
    %27 = vector.broadcast %23 : vector<16x1xf32> to vector<16x256xf32>
    %28 = arith.mulf %27, %26 : vector<16x256xf32>
    %29 = arith.addf %21, %28 : vector<16x256xf32>
    %c16_i32 = arith.constant 16 : i32
    %30 = tpu.dynamic_rotate %18 by %c16_i32 dim 1 : vector<16x256xf32>, i32 -> vector<16x256xf32>
    %31 = vector.extract_strided_slice %0 {offsets = [0, 5], sizes = [16, 1], strides = [1, 1]} : vector<16x13xf32> to vector<16x1xf32>
    %c1 = arith.constant 1 : index
    %c0_9 = arith.constant 0 : index
    %32 = vector.load %arg6[%c1, %c0_9] : memref<9x256xf32, #tpu.memory_space<vmem>>, vector<1x256xf32>
    %33 = vector.broadcast %32 : vector<1x256xf32> to vector<16x256xf32>
    %34 = arith.mulf %30, %33 : vector<16x256xf32>
    %35 = vector.broadcast %31 : vector<16x1xf32> to vector<16x256xf32>
    %36 = arith.mulf %35, %34 : vector<16x256xf32>
    %37 = arith.addf %29, %36 : vector<16x256xf32>
    %c15_i32 = arith.constant 15 : i32
    %38 = tpu.dynamic_rotate %18 by %c15_i32 dim 1 : vector<16x256xf32>, i32 -> vector<16x256xf32>
    %39 = vector.extract_strided_slice %0 {offsets = [0, 6], sizes = [16, 1], strides = [1, 1]} : vector<16x13xf32> to vector<16x1xf32>
    %c2 = arith.constant 2 : index
    %c0_10 = arith.constant 0 : index
    %40 = vector.load %arg6[%c2, %c0_10] : memref<9x256xf32, #tpu.memory_space<vmem>>, vector<1x256xf32>
    %41 = vector.broadcast %40 : vector<1x256xf32> to vector<16x256xf32>
    %42 = arith.mulf %38, %41 : vector<16x256xf32>
    %43 = vector.broadcast %39 : vector<16x1xf32> to vector<16x256xf32>
    %44 = arith.mulf %43, %42 : vector<16x256xf32>
    %45 = arith.addf %37, %44 : vector<16x256xf32>
    %c1_i32 = arith.constant 1 : i32
    %46 = tpu.dynamic_rotate %18 by %c1_i32 dim 1 : vector<16x256xf32>, i32 -> vector<16x256xf32>
    %47 = vector.extract_strided_slice %0 {offsets = [0, 7], sizes = [16, 1], strides = [1, 1]} : vector<16x13xf32> to vector<16x1xf32>
    %c3 = arith.constant 3 : index
    %c0_11 = arith.constant 0 : index
    %48 = vector.load %arg6[%c3, %c0_11] : memref<9x256xf32, #tpu.memory_space<vmem>>, vector<1x256xf32>
    %49 = vector.broadcast %48 : vector<1x256xf32> to vector<16x256xf32>
    %50 = arith.mulf %46, %49 : vector<16x256xf32>
    %51 = vector.broadcast %47 : vector<16x1xf32> to vector<16x256xf32>
    %52 = arith.mulf %51, %50 : vector<16x256xf32>
    %53 = arith.addf %45, %52 : vector<16x256xf32>
    %c255_i32 = arith.constant 255 : i32
    %54 = tpu.dynamic_rotate %18 by %c255_i32 dim 1 : vector<16x256xf32>, i32 -> vector<16x256xf32>
    %55 = vector.extract_strided_slice %0 {offsets = [0, 9], sizes = [16, 1], strides = [1, 1]} : vector<16x13xf32> to vector<16x1xf32>
    %c5 = arith.constant 5 : index
    %c0_12 = arith.constant 0 : index
    %56 = vector.load %arg6[%c5, %c0_12] : memref<9x256xf32, #tpu.memory_space<vmem>>, vector<1x256xf32>
    %57 = vector.broadcast %56 : vector<1x256xf32> to vector<16x256xf32>
    %58 = arith.mulf %54, %57 : vector<16x256xf32>
    %59 = vector.broadcast %55 : vector<16x1xf32> to vector<16x256xf32>
    %60 = arith.mulf %59, %58 : vector<16x256xf32>
    %61 = arith.addf %53, %60 : vector<16x256xf32>
    %c241_i32 = arith.constant 241 : i32
    %62 = tpu.dynamic_rotate %18 by %c241_i32 dim 1 : vector<16x256xf32>, i32 -> vector<16x256xf32>
    %63 = vector.extract_strided_slice %0 {offsets = [0, 10], sizes = [16, 1], strides = [1, 1]} : vector<16x13xf32> to vector<16x1xf32>
    %c6 = arith.constant 6 : index
    %c0_13 = arith.constant 0 : index
    %64 = vector.load %arg6[%c6, %c0_13] : memref<9x256xf32, #tpu.memory_space<vmem>>, vector<1x256xf32>
    %65 = vector.broadcast %64 : vector<1x256xf32> to vector<16x256xf32>
    %66 = arith.mulf %62, %65 : vector<16x256xf32>
    %67 = vector.broadcast %63 : vector<16x1xf32> to vector<16x256xf32>
    %68 = arith.mulf %67, %66 : vector<16x256xf32>
    %69 = arith.addf %61, %68 : vector<16x256xf32>
    %c240_i32 = arith.constant 240 : i32
    %70 = tpu.dynamic_rotate %18 by %c240_i32 dim 1 : vector<16x256xf32>, i32 -> vector<16x256xf32>
    %71 = vector.extract_strided_slice %0 {offsets = [0, 11], sizes = [16, 1], strides = [1, 1]} : vector<16x13xf32> to vector<16x1xf32>
    %c7 = arith.constant 7 : index
    %c0_14 = arith.constant 0 : index
    %72 = vector.load %arg6[%c7, %c0_14] : memref<9x256xf32, #tpu.memory_space<vmem>>, vector<1x256xf32>
    %73 = vector.broadcast %72 : vector<1x256xf32> to vector<16x256xf32>
    %74 = arith.mulf %70, %73 : vector<16x256xf32>
    %75 = vector.broadcast %71 : vector<16x1xf32> to vector<16x256xf32>
    %76 = arith.mulf %75, %74 : vector<16x256xf32>
    %77 = arith.addf %69, %76 : vector<16x256xf32>
    %c239_i32 = arith.constant 239 : i32
    %78 = tpu.dynamic_rotate %18 by %c239_i32 dim 1 : vector<16x256xf32>, i32 -> vector<16x256xf32>
    %79 = vector.extract_strided_slice %0 {offsets = [0, 12], sizes = [16, 1], strides = [1, 1]} : vector<16x13xf32> to vector<16x1xf32>
    %c8 = arith.constant 8 : index
    %c0_15 = arith.constant 0 : index
    %80 = vector.load %arg6[%c8, %c0_15] : memref<9x256xf32, #tpu.memory_space<vmem>>, vector<1x256xf32>
    %81 = vector.broadcast %80 : vector<1x256xf32> to vector<16x256xf32>
    %82 = arith.mulf %78, %81 : vector<16x256xf32>
    %83 = vector.broadcast %79 : vector<16x1xf32> to vector<16x256xf32>
    %84 = arith.mulf %83, %82 : vector<16x256xf32>
    %85 = arith.addf %77, %84 : vector<16x256xf32>
    %c0_16 = arith.constant 0 : index
    %c0_17 = arith.constant 0 : index
    %86 = vector.load %arg1[%c0_16, %c0_17] : memref<8x256xf32, #tpu.memory_space<vmem>>, vector<8x256xf32>
    %87 = vector.extract_strided_slice %0 {offsets = [0, 3], sizes = [8, 1], strides = [1, 1]} : vector<16x13xf32> to vector<8x1xf32>
    %88 = vector.broadcast %87 : vector<8x1xf32> to vector<8x256xf32>
    %89 = arith.addf %86, %88 : vector<8x256xf32>
    %90 = vector.extract_strided_slice %85 {offsets = [0, 0], sizes = [8, 256], strides = [1, 1]} : vector<16x256xf32> to vector<8x256xf32>
    %91 = arith.addf %89, %90 : vector<8x256xf32>
    %92 = vector.extract_strided_slice %85 {offsets = [8, 0], sizes = [8, 256], strides = [1, 1]} : vector<16x256xf32> to vector<8x256xf32>
    %93 = arith.addf %91, %92 : vector<8x256xf32>
    %cst_18 = arith.constant 5.000000e-01 : f32
    %94 = vector.broadcast %cst_18 : f32 to vector<8x256xf32>
    %95 = arith.mulf %94, %93 : vector<8x256xf32>
    %cst_19 = arith.constant 0.707106769 : f32
    %96 = vector.broadcast %cst_19 : f32 to vector<8x256xf32>
    %97 = arith.mulf %93, %96 : vector<8x256xf32>
    %98 = math.erf %97 : vector<8x256xf32>
    %cst_20 = arith.constant 1.000000e+00 : f32
    %99 = vector.broadcast %cst_20 : f32 to vector<8x256xf32>
    %100 = arith.addf %99, %98 : vector<8x256xf32>
    %101 = arith.mulf %95, %100 : vector<8x256xf32>
    %c0_21 = arith.constant 0 : index
    %c0_22 = arith.constant 0 : index
    %102 = vector.load %arg7[%c0_21, %c0_22] : memref<8x256xf32, #tpu.memory_space<vmem>>, vector<8x256xf32>
    tpu.vector_store %arg7[%c0_21, %c0_22], %101 {strides = array<i32>} : memref<8x256xf32, #tpu.memory_space<vmem>>, vector<8x256xf32>,
    return
  }
  func.func @transform_0(%arg0: i32) -> (i32, i32) {
    %c0_i32 = arith.constant 0 : i32
    %c0_i32_0 = arith.constant 0 : i32
    %c0_i32_1 = arith.constant 0 : i32
    return %c0_i32, %c0_i32_0 : i32, i32
  }
  func.func @transform_1(%arg0: i32) -> (i32, i32) {
    %c0_i32 = arith.constant 0 : i32
    %c0_i32_0 = arith.constant 0 : i32
    %c0_i32_1 = arith.constant 0 : i32
    return %c0_i32, %c0_i32_0 : i32, i32
  }
  func.func @transform_2(%arg0: i32) -> (i32, i32) {
    %c0_i32 = arith.constant 0 : i32
    %c0_i32_0 = arith.constant 0 : i32
    %c0_i32_1 = arith.constant 0 : i32
    return %c0_i32, %c0_i32_0 : i32, i32
  }
  func.func @transform_3(%arg0: i32) -> (i32, i32) {
    %c0_i32 = arith.constant 0 : i32
    %c0_i32_0 = arith.constant 0 : i32
    %c0_i32_1 = arith.constant 0 : i32
    return %c0_i32, %c0_i32_0 : i32, i32
  }
  func.func @transform_4(%arg0: i32) -> (i32, i32) {
    %c0_i32 = arith.constant 0 : i32
    %c0_i32_0 = arith.constant 0 : i32
    %c0_i32_1 = arith.constant 0 : i32
    return %c0_i32, %c0_i32_0 : i32, i32
  }
  func.func @transform_5(%arg0: i32) -> (i32, i32) {
    %c0_i32 = arith.constant 0 : i32
    %c0_i32_0 = arith.constant 0 : i32
    %c0_i32_1 = arith.constant 0 : i32
    return %c0_i32, %c0_i32_0 : i32, i32
  }
  func.func @transform_6(%arg0: i32) -> (i32, i32) {
    %c0_i32 = arith.constant 0 : i32
    %c0_i32_0 = arith.constant 0 : i32
    %c0_i32_1 = arith.constant 0 : i32
    return %c0_i32, %c0_i32_0 : i32, i32
  }
}

</mosaic_0001>

<llo_original>
// kernel: apply.1
$region0: #{apply.1}
  #allocation0 [shape = 'u32[]', space=smem, size = 0x4, offset = 0x4, fixed_abs, tag = 'smem constant byte address 0x4 - core index']
  #allocation1 [shape = 'u32[144,128]{1,0:T(1,128)}', space=vmem, size = 0x12000, scoped, tag = 'internal scratch']
  %s0 = inlined_call_operand.vmem [shape: f32[8,256], index: 0, kind: input, shape index: {}]
  %s1 = inlined_call_operand.vmem [shape: f32[16,256], index: 1, kind: input, shape index: {}]
  %s2 = inlined_call_operand.hbm [shape: f32[256,512], index: 2, kind: input, shape index: {}]
  %s3 = inlined_call_operand.vmem [shape: f32[1,512], index: 3, kind: input, shape index: {}]
  %s4 = inlined_call_operand.vmem [shape: f32[16,13], index: 4, kind: input, shape index: {}]
  %s5 = inlined_call_operand.vmem [shape: f32[9,256], index: 5, kind: input, shape index: {}]
  %s6 = inlined_call_operand.vmem [shape: f32[8,256], index: 6, kind: output, shape index: {}]
  %s7 = sld [smem:[#allocation0]]
  $region38: #{apply.1} parent=0
    _
  %s9 = ssub.s32 1, %s7
  %s10 = scalar_select 0, %s9, %s7
  $region1: #{apply.1} parent=0
    #allocation2 [shape = 'u8[524288]{0}', space=vmem, size = 0x80000, scoped, tag = 'input window, operand 2, single buffered']
    #allocation3 [shape = 's32[1]{0}', space=sflag, size = 0x4, scoped, tag = 'scoped memory for apply.1']
    %11 = vsyncpa [#allocation3], 0
    // Predicated region
    $region2: #{apply.1} parent=1 // pred_check
      _
    $region3: #{apply.1} parent=1 // pred_check_branch
      %13 = sbr.rel (0) target = $region5
    $region4: #{apply.1} parent=1 // pred_region
      _
    $region5: #{apply.1} parent=1 // pred_fallthru
      _
    // Predicated region
    $region6: #{apply.1} parent=1 // pred_check
      _
    $region7: #{apply.1} parent=1 // pred_check_branch
      %15 = sbr.rel (0) target = $region9
    $region8: #{apply.1} parent=1 // pred_region
      _
    $region9: #{apply.1} parent=1 // pred_fallthru
      _
    // Predicated region
    $region10: #{apply.1} parent=1 // pred_check
      _
    $region11: #{apply.1} parent=1 // pred_check_branch
      %17 = sbr.rel (0) target = $region13
    $region12: #{apply.1} parent=1 // pred_region
      %s19 = ssub.s32 16384, 16384
      %20 = vsyncadd [#allocation3], %s19
      %s21 = sshll.u32 [#allocation2], 4
      %s22 = int_to_ptr.vmem [resolvable:$true] %s21
      %27 = dma.hbm_to_vmem [thread:$0]  %s2, 16384, %s22, [#allocation3], 512, 512, 32
    $region13: #{apply.1} parent=1 // pred_fallthru
      _
    // Predicated region
    $region14: #{apply.1} parent=1 // pred_check
      _
    $region15: #{apply.1} parent=1 // pred_check_branch
      %29 = sbr.rel (0) target = $region17
    $region16: #{apply.1} parent=1 // pred_region
      _
    $region17: #{apply.1} parent=1 // pred_fallthru
      _
    // Predicated region
    $region18: #{apply.1} parent=1 // pred_check
      _
    $region19: #{apply.1} parent=1 // pred_check_branch
      %31 = sbr.rel (0) target = $region21
    $region20: #{apply.1} parent=1 // pred_region
      _
    $region21: #{apply.1} parent=1 // pred_fallthru
      _
    // Predicated region
    $region22: #{apply.1} parent=1 // pred_check
      _
    $region23: #{apply.1} parent=1 // pred_check_branch
      %33 = sbr.rel (0) target = $region25
    $region24: #{apply.1} parent=1 // pred_region
      _
    $region25: #{apply.1} parent=1 // pred_fallthru
      _
    // Predicated region
    $region26: #{apply.1} parent=1 // pred_check
      _
    $region27: #{apply.1} parent=1 // pred_check_branch
      %35 = sbr.rel (0) target = $region29
    $region28: #{apply.1} parent=1 // pred_region
      %36 = dma.done [#allocation3], 16384
    $region29: #{apply.1} parent=1 // pred_fallthru
      _
    %v37 = vld [vmem:[%s4] sm:$0xff]
    %v38 = vld [vmem:[%s4 + $0x8] sm:$0xff]
    %v39 = vld [vmem:[%s1] sm:$0xff]
    %v40 = vld [vmem:[%s1 + $0x8] sm:$0xff]
    %v41 = vld [vmem:[%s1 + $0x10] sm:$0xff]
    %v42 = vld [vmem:[%s1 + $0x18] sm:$0xff]
    %v43 = vld [vmem:[#allocation2] sm:$0xff]
    %v44 = vld [vmem:[#allocation2 + $0x8] sm:$0xff]
    %v45 = vld [vmem:[#allocation2 + $0x10] sm:$0xff]
    %v46 = vld [vmem:[#allocation2 + $0x18] sm:$0xff]
    %v47 = vld [vmem:[#allocation2 + $0x20] sm:$0xff]
    %v48 = vld [vmem:[#allocation2 + $0x28] sm:$0xff]
    %v49 = vld [vmem:[#allocation2 + $0x30] sm:$0xff]
    %v50 = vld [vmem:[#allocation2 + $0x38] sm:$0xff]
    %v51 = vld [vmem:[#allocation2 + $0x40] sm:$0xff]
    %v52 = vld [vmem:[#allocation2 + $0x48] sm:$0xff]
    %v53 = vld [vmem:[#allocation2 + $0x50] sm:$0xff]
    %v54 = vld [vmem:[#allocation2 + $0x58] sm:$0xff]
    %v55 = vld [vmem:[#allocation2 + $0x60] sm:$0xff]
    %v56 = vld [vmem:[#allocation2 + $0x68] sm:$0xff]
    %v57 = vld [vmem:[#allocation2 + $0x70] sm:$0xff]
    %v58 = vld [vmem:[#allocation2 + $0x78] sm:$0xff]
    %v59 = vld [vmem:[#allocation2 + $0x80] sm:$0xff]
    %v60 = vld [vmem:[#allocation2 + $0x88] sm:$0xff]
    %v61 = vld [vmem:[#allocation2 + $0x90] sm:$0xff]
    %v62 = vld [vmem:[#allocation2 + $0x98] sm:$0xff]
    %v63 = vld [vmem:[#allocation2 + $0xa0] sm:$0xff]
    %v64 = vld [vmem:[#allocation2 + $0xa8] sm:$0xff]
    %v65 = vld [vmem:[#allocation2 + $0xb0] sm:$0xff]
    %v66 = vld [vmem:[#allocation2 + $0xb8] sm:$0xff]
    %v67 = vld [vmem:[#allocation2 + $0xc0] sm:$0xff]
    %v68 = vld [vmem:[#allocation2 + $0xc8] sm:$0xff]
    %v69 = vld [vmem:[#allocation2 + $0xd0] sm:$0xff]
    %v70 = vld [vmem:[#allocation2 + $0xd8] sm:$0xff]
    %v71 = vld [vmem:[#allocation2 + $0xe0] sm:$0xff]
    %v72 = vld [vmem:[#allocation2 + $0xe8] sm:$0xff]
    %v73 = vld [vmem:[#allocation2 + $0xf0] sm:$0xff]
    %v74 = vld [vmem:[#allocation2 + $0xf8] sm:$0xff]
    %v75 = vld [vmem:[#allocation2 + $0x100] sm:$0xff]
    %v76 = vld [vmem:[#allocation2 + $0x108] sm:$0xff]
    %v77 = vld [vmem:[#allocation2 + $0x110] sm:$0xff]
    %v78 = vld [vmem:[#allocation2 + $0x118] sm:$0xff]
    %v79 = vld [vmem:[#allocation2 + $0x120] sm:$0xff]
    %v80 = vld [vmem:[#allocation2 + $0x128] sm:$0xff]
    %v81 = vld [vmem:[#allocation2 + $0x130] sm:$0xff]
    %v82 = vld [vmem:[#allocation2 + $0x138] sm:$0xff]
    %v83 = vld [vmem:[#allocation2 + $0x140] sm:$0xff]
    %v84 = vld [vmem:[#allocation2 + $0x148] sm:$0xff]
    %v85 = vld [vmem:[#allocation2 + $0x150] sm:$0xff]
    %v86 = vld [vmem:[#allocation2 + $0x158] sm:$0xff]
    %v87 = vld [vmem:[#allocation2 + $0x160] sm:$0xff]
    %v88 = vld [vmem:[#allocation2 + $0x168] sm:$0xff]
    %v89 = vld [vmem:[#allocation2 + $0x170] sm:$0xff]
    %v90 = vld [vmem:[#allocation2 + $0x178] sm:$0xff]
    %v91 = vld [vmem:[#allocation2 + $0x180] sm:$0xff]
    %v92 = vld [vmem:[#allocation2 + $0x188] sm:$0xff]
    %v93 = vld [vmem:[#allocation2 + $0x190] sm:$0xff]
    %v94 = vld [vmem:[#allocation2 + $0x198] sm:$0xff]
    %v95 = vld [vmem:[#allocation2 + $0x1a0] sm:$0xff]
    %v96 = vld [vmem:[#allocation2 + $0x1a8] sm:$0xff]
    %v97 = vld [vmem:[#allocation2 + $0x1b0] sm:$0xff]
    %v98 = vld [vmem:[#allocation2 + $0x1b8] sm:$0xff]
    %v99 = vld [vmem:[#allocation2 + $0x1c0] sm:$0xff]
    %v100 = vld [vmem:[#allocation2 + $0x1c8] sm:$0xff]
    %v101 = vld [vmem:[#allocation2 + $0x1d0] sm:$0xff]
    %v102 = vld [vmem:[#allocation2 + $0x1d8] sm:$0xff]
    %v103 = vld [vmem:[#allocation2 + $0x1e0] sm:$0xff]
    %v104 = vld [vmem:[#allocation2 + $0x1e8] sm:$0xff]
    %v105 = vld [vmem:[#allocation2 + $0x1f0] sm:$0xff]
    %v106 = vld [vmem:[#allocation2 + $0x1f8] sm:$0xff]
    %v107 = vld [vmem:[#allocation2 + $0x200] sm:$0xff]
    %v108 = vld [vmem:[#allocation2 + $0x208] sm:$0xff]
    %v109 = vld [vmem:[#allocation2 + $0x210] sm:$0xff]
    %v110 = vld [vmem:[#allocation2 + $0x218] sm:$0xff]
    %v111 = vld [vmem:[#allocation2 + $0x220] sm:$0xff]
    %v112 = vld [vmem:[#allocation2 + $0x228] sm:$0xff]
    %v113 = vld [vmem:[#allocation2 + $0x230] sm:$0xff]
    %v114 = vld [vmem:[#allocation2 + $0x238] sm:$0xff]
    %v115 = vld [vmem:[#allocation2 + $0x240] sm:$0xff]
    %v116 = vld [vmem:[#allocation2 + $0x248] sm:$0xff]
    %v117 = vld [vmem:[#allocation2 + $0x250] sm:$0xff]
    %v118 = vld [vmem:[#allocation2 + $0x258] sm:$0xff]
    %v119 = vld [vmem:[#allocation2 + $0x260] sm:$0xff]
    %v120 = vld [vmem:[#allocation2 + $0x268] sm:$0xff]
    %v121 = vld [vmem:[#allocation2 + $0x270] sm:$0xff]
    %v122 = vld [vmem:[#allocation2 + $0x278] sm:$0xff]
    %v123 = vld [vmem:[#allocation2 + $0x280] sm:$0xff]
    %v124 = vld [vmem:[#allocation2 + $0x288] sm:$0xff]
    %v125 = vld [vmem:[#allocation2 + $0x290] sm:$0xff]
    %v126 = vld [vmem:[#allocation2 + $0x298] sm:$0xff]
    %v127 = vld [vmem:[#allocation2 + $0x2a0] sm:$0xff]
    %v128 = vld [vmem:[#allocation2 + $0x2a8] sm:$0xff]
    %v129 = vld [vmem:[#allocation2 + $0x2b0] sm:$0xff]
    %v130 = vld [vmem:[#allocation2 + $0x2b8] sm:$0xff]
    %v131 = vld [vmem:[#allocation2 + $0x2c0] sm:$0xff]
    %v132 = vld [vmem:[#allocation2 + $0x2c8] sm:$0xff]
    %v133 = vld [vmem:[#allocation2 + $0x2d0] sm:$0xff]
    %v134 = vld [vmem:[#allocation2 + $0x2d8] sm:$0xff]
    %v135 = vld [vmem:[#allocation2 + $0x2e0] sm:$0xff]
    %v136 = vld [vmem:[#allocation2 + $0x2e8] sm:$0xff]
    %v137 = vld [vmem:[#allocation2 + $0x2f0] sm:$0xff]
    %v138 = vld [vmem:[#allocation2 + $0x2f8] sm:$0xff]
    %v139 = vld [vmem:[#allocation2 + $0x300] sm:$0xff]
    %v140 = vld [vmem:[#allocation2 + $0x308] sm:$0xff]
    %v141 = vld [vmem:[#allocation2 + $0x310] sm:$0xff]
    %v142 = vld [vmem:[#allocation2 + $0x318] sm:$0xff]
    %v143 = vld [vmem:[#allocation2 + $0x320] sm:$0xff]
    %v144 = vld [vmem:[#allocation2 + $0x328] sm:$0xff]
    %v145 = vld [vmem:[#allocation2 + $0x330] sm:$0xff]
    %v146 = vld [vmem:[#allocation2 + $0x338] sm:$0xff]
    %v147 = vld [vmem:[#allocation2 + $0x340] sm:$0xff]
    %v148 = vld [vmem:[#allocation2 + $0x348] sm:$0xff]
    %v149 = vld [vmem:[#allocation2 + $0x350] sm:$0xff]
    %v150 = vld [vmem:[#allocation2 + $0x358] sm:$0xff]
    %v151 = vld [vmem:[#allocation2 + $0x360] sm:$0xff]
    %v152 = vld [vmem:[#allocation2 + $0x368] sm:$0xff]
    %v153 = vld [vmem:[#allocation2 + $0x370] sm:$0xff]
    %v154 = vld [vmem:[#allocation2 + $0x378] sm:$0xff]
    %v155 = vld [vmem:[#allocation2 + $0x380] sm:$0xff]
    %v156 = vld [vmem:[#allocation2 + $0x388] sm:$0xff]
    %v157 = vld [vmem:[#allocation2 + $0x390] sm:$0xff]
    %v158 = vld [vmem:[#allocation2 + $0x398] sm:$0xff]
    %v159 = vld [vmem:[#allocation2 + $0x3a0] sm:$0xff]
    %v160 = vld [vmem:[#allocation2 + $0x3a8] sm:$0xff]
    %v161 = vld [vmem:[#allocation2 + $0x3b0] sm:$0xff]
    %v162 = vld [vmem:[#allocation2 + $0x3b8] sm:$0xff]
    %v163 = vld [vmem:[#allocation2 + $0x3c0] sm:$0xff]
    %v164 = vld [vmem:[#allocation2 + $0x3c8] sm:$0xff]
    %v165 = vld [vmem:[#allocation2 + $0x3d0] sm:$0xff]
    %v166 = vld [vmem:[#allocation2 + $0x3d8] sm:$0xff]
    %v167 = vld [vmem:[#allocation2 + $0x3e0] sm:$0xff]
    %v168 = vld [vmem:[#allocation2 + $0x3e8] sm:$0xff]
    %v169 = vld [vmem:[#allocation2 + $0x3f0] sm:$0xff]
    %v170 = vld [vmem:[#allocation2 + $0x3f8] sm:$0xff]
    %v171 = vld [vmem:[%s3] sm:$0xf]
    %v173 = vlaneseq
    %v174 = vshrl.u32 %v173, 7
    %v175 = vsub.s32 0, %v174
    %v176 = vrot.slane %v171, %v175
    %v177 = vlaneseq
    %v178 = vshrl.u32 %v177, 7
    %v179 = vsub.s32 1, %v178
    %v180 = vrot.slane %v171, %v179
    %v181 = vlaneseq
    %v182 = vshrl.u32 %v181, 7
    %v183 = vsub.s32 2, %v182
    %v184 = vrot.slane %v171, %v183
    %v185 = vlaneseq
    %v186 = vshrl.u32 %v185, 7
    %v187 = vsub.s32 3, %v186
    %v188 = vrot.slane %v171, %v187
    %193 = vmatprep.subr.mxu0 %v44
    %194 = vmatpush1.msra.mxu0 %v43
    %195 = vmatprep.subr.mxu0 %v48
    %196 = vmatpush1.msra.mxu0 %v47
    %197 = vmatprep.subr.mxu0 %v52
    %198 = vmatpush1.msra.mxu0 %v51
    %199 = vmatprep.subr.mxu0 %v56
    %200 = vmatpush1.msra.mxu0 %v55
    %201 = vmatprep.subr.mxu0 %v60
    %202 = vmatpush1.msra.mxu0 %v59
    %203 = vmatprep.subr.mxu0 %v64
    %204 = vmatpush1.msra.mxu0 %v63
    %205 = vmatprep.subr.mxu0 %v68
    %206 = vmatpush1.msra.mxu0 %v67
    %207 = vmatprep.subr.mxu0 %v72
    %208 = vmatpush1.msra.mxu0 %v71
    %209 = vmatprep.subr.mxu0 %v76
    %210 = vmatpush1.msra.mxu0 %v75
    %211 = vmatprep.subr.mxu0 %v80
    %212 = vmatpush1.msra.mxu0 %v79
    %213 = vmatprep.subr.mxu0 %v84
    %214 = vmatpush1.msra.mxu0 %v83
    %215 = vmatprep.subr.mxu0 %v88
    %216 = vmatpush1.msra.mxu0 %v87
    %217 = vmatprep.subr.mxu0 %v92
    %218 = vmatpush1.msra.mxu0 %v91
    %219 = vmatprep.subr.mxu0 %v96
    %220 = vmatpush1.msra.mxu0 %v95
    %221 = vmatprep.subr.mxu0 %v100
    %222 = vmatpush1.msra.mxu0 %v99
    %223 = vmatprep.subr.mxu0 %v104
    %224 = vmatpush1.msra.mxu0 %v103
    %225 = vmatprep.subr.mxu0 %v108
    %226 = vmatpush1.msra.mxu0 %v107
    %227 = vmatprep.subr.mxu0 %v112
    %228 = vmatpush1.msra.mxu0 %v111
    %229 = vmatprep.subr.mxu0 %v116
    %230 = vmatpush1.msra.mxu0 %v115
    %231 = vmatprep.subr.mxu0 %v120
    %232 = vmatpush1.msra.mxu0 %v119
    %233 = vmatprep.subr.mxu0 %v124
    %234 = vmatpush1.msra.mxu0 %v123
    %235 = vmatprep.subr.mxu0 %v128
    %236 = vmatpush1.msra.mxu0 %v127
    %237 = vmatprep.subr.mxu0 %v132
    %238 = vmatpush1.msra.mxu0 %v131
    %239 = vmatprep.subr.mxu0 %v136
    %240 = vmatpush1.msra.mxu0 %v135
    %241 = vmatprep.subr.mxu0 %v140
    %242 = vmatpush1.msra.mxu0 %v139
    %243 = vmatprep.subr.mxu0 %v144
    %244 = vmatpush1.msra.mxu0 %v143
    %245 = vmatprep.subr.mxu0 %v148
    %246 = vmatpush1.msra.mxu0 %v147
    %247 = vmatprep.subr.mxu0 %v152
    %248 = vmatpush1.msra.mxu0 %v151
    %249 = vmatprep.subr.mxu0 %v156
    %250 = vmatpush1.msra.mxu0 %v155
    %251 = vmatprep.subr.mxu0 %v160
    %252 = vmatpush1.msra.mxu0 %v159
    %253 = vmatprep.subr.mxu0 %v164
    %254 = vmatpush1.msra.mxu0 %v163
    %255 = vmatprep.subr.mxu0 %v168
    %256 = vmatpush1.msra.mxu0 %v167
    %257 = vmatprep.mubr.f32.mxu0 %v40
    %258 = vmatmul.mubr.f32.gmra.mrb[0].mxu0 %v39
    %v259 = vpop.f32.mrb[0].mxu0
    %v260 = vadd.f32 %v176, %v259
    %v261 = vpop.f32.mrb[0].mxu0
    %v262 = vadd.f32 %v180, %v261
    %263 = vmatprep.mubr.f32.mxu0 %v42
    %264 = vmatmul.mubr.f32.gmra.mrb[0].mxu0 %v41
    %v265 = vpop.f32.mrb[0].mxu0
    %v266 = vadd.f32 %v176, %v265
    %v267 = vpop.f32.mrb[0].mxu0
    %v268 = vadd.f32 %v180, %v267
    %269 = vdwg.mxu0
    %270 = vmatprep.subr.mxu0 %v46
    %271 = vmatpush1.msra.mxu0 %v45
    %272 = vmatprep.subr.mxu0 %v50
    %273 = vmatpush1.msra.mxu0 %v49
    %274 = vmatprep.subr.mxu0 %v54
    %275 = vmatpush1.msra.mxu0 %v53
    %276 = vmatprep.subr.mxu0 %v58
    %277 = vmatpush1.msra.mxu0 %v57
    %278 = vmatprep.subr.mxu0 %v62
    %279 = vmatpush1.msra.mxu0 %v61
    %280 = vmatprep.subr.mxu0 %v66
    %281 = vmatpush1.msra.mxu0 %v65
    %282 = vmatprep.subr.mxu0 %v70
    %283 = vmatpush1.msra.mxu0 %v69
    %284 = vmatprep.subr.mxu0 %v74
    %285 = vmatpush1.msra.mxu0 %v73
    %286 = vmatprep.subr.mxu0 %v78
    %287 = vmatpush1.msra.mxu0 %v77
    %288 = vmatprep.subr.mxu0 %v82
    %289 = vmatpush1.msra.mxu0 %v81
    %290 = vmatprep.subr.mxu0 %v86
    %291 = vmatpush1.msra.mxu0 %v85
    %292 = vmatprep.subr.mxu0 %v90
    %293 = vmatpush1.msra.mxu0 %v89
    %294 = vmatprep.subr.mxu0 %v94
    %295 = vmatpush1.msra.mxu0 %v93
    %296 = vmatprep.subr.mxu0 %v98
    %297 = vmatpush1.msra.mxu0 %v97
    %298 = vmatprep.subr.mxu0 %v102
    %299 = vmatpush1.msra.mxu0 %v101
    %300 = vmatprep.subr.mxu0 %v106
    %301 = vmatpush1.msra.mxu0 %v105
    %302 = vmatprep.subr.mxu0 %v110
    %303 = vmatpush1.msra.mxu0 %v109
    %304 = vmatprep.subr.mxu0 %v114
    %305 = vmatpush1.msra.mxu0 %v113
    %306 = vmatprep.subr.mxu0 %v118
    %307 = vmatpush1.msra.mxu0 %v117
    %308 = vmatprep.subr.mxu0 %v122
    %309 = vmatpush1.msra.mxu0 %v121
    %310 = vmatprep.subr.mxu0 %v126
    %311 = vmatpush1.msra.mxu0 %v125
    %312 = vmatprep.subr.mxu0 %v130
    %313 = vmatpush1.msra.mxu0 %v129
    %314 = vmatprep.subr.mxu0 %v134
    %315 = vmatpush1.msra.mxu0 %v133
    %316 = vmatprep.subr.mxu0 %v138
    %317 = vmatpush1.msra.mxu0 %v137
    %318 = vmatprep.subr.mxu0 %v142
    %319 = vmatpush1.msra.mxu0 %v141
    %320 = vmatprep.subr.mxu0 %v146
    %321 = vmatpush1.msra.mxu0 %v145
    %322 = vmatprep.subr.mxu0 %v150
    %323 = vmatpush1.msra.mxu0 %v149
    %324 = vmatprep.subr.mxu0 %v154
    %325 = vmatpush1.msra.mxu0 %v153
    %326 = vmatprep.subr.mxu0 %v158
    %327 = vmatpush1.msra.mxu0 %v157
    %328 = vmatprep.subr.mxu0 %v162
    %329 = vmatpush1.msra.mxu0 %v161
    %330 = vmatprep.subr.mxu0 %v166
    %331 = vmatpush1.msra.mxu0 %v165
    %332 = vmatprep.subr.mxu0 %v170
    %333 = vmatpush1.msra.mxu0 %v169
    %334 = vmatprep.mubr.f32.mxu0 %v40
    %335 = vmatmul.mubr.f32.gmra.mrb[0].mxu0 %v39
    %v336 = vpop.f32.mrb[0].mxu0
    %v337 = vadd.f32 %v184, %v336
    %v338 = vpop.f32.mrb[0].mxu0
    %v339 = vadd.f32 %v188, %v338
    %340 = vmatprep.mubr.f32.mxu0 %v42
    %341 = vmatmul.mubr.f32.gmra.mrb[0].mxu0 %v41
    %v342 = vpop.f32.mrb[0].mxu0
    %v343 = vadd.f32 %v184, %v342
    %v344 = vpop.f32.mrb[0].mxu0
    %v345 = vadd.f32 %v188, %v344
    %346 = vdwg.mxu0
    %348 = vset.pattern.permute.xlu0 0
    %349 = vperm.xlu0 %348, %v37
    %v350 = vpop.permute.xlu0 %349
    %353 = vset.pattern.permute.xlu0 0
    %354 = vperm.xlu0 %353, %v38
    %v355 = vpop.permute.xlu0 %354
    %v357 = vmul.f32 %v260, %v350
    %v358 = vmul.f32 %v262, %v350
    %v359 = vmul.f32 %v266, %v355
    %v360 = vmul.f32 %v268, %v355
    %361 = vset.pattern.permute.xlu0 1
    %362 = vperm.xlu0 %361, %v37
    %v363 = vpop.permute.xlu0 %362
    %365 = vset.pattern.permute.xlu0 1
    %366 = vperm.xlu0 %365, %v38
    %v367 = vpop.permute.xlu0 %366
    %v369 = vmul.f32 %v337, %v363
    %v370 = vmul.f32 %v339, %v363
    %v371 = vmul.f32 %v343, %v367
    %v372 = vmul.f32 %v345, %v367
    %v373 = vadd.f32 %v357, %v369
    %v374 = vadd.f32 %v358, %v370
    %v375 = vadd.f32 %v359, %v371
    %v376 = vadd.f32 %v360, %v372
    %377 = vset.pattern.permute.xlu0 2
    %378 = vperm.xlu0 %377, %v37
    %v379 = vpop.permute.xlu0 %378
    %381 = vset.pattern.permute.xlu0 2
    %382 = vperm.xlu0 %381, %v38
    %v383 = vpop.permute.xlu0 %382
    %v385 = vadd.f32 %v373, %v379
    %v386 = vadd.f32 %v374, %v379
    %v387 = vadd.f32 %v375, %v383
    %v388 = vadd.f32 %v376, %v383
    %389 = vset.pattern.permute.xlu0 8
    %390 = vperm.xlu0 %389, %v37
    %v391 = vpop.permute.xlu0 %390
    %393 = vset.pattern.permute.xlu0 8
    %394 = vperm.xlu0 %393, %v38
    %v395 = vpop.permute.xlu0 %394
    %v397 = vmul.f32 %v391, %v385
    %v398 = vmul.f32 %v391, %v386
    %v399 = vmul.f32 %v395, %v387
    %v400 = vmul.f32 %v395, %v388
    %401 = vrot.lane.b32.xlu0 %v385, 17
    %v402 = vpop.permute.xlu0 %401
    %403 = vrot.lane.b32.xlu0 %v387, 17
    %v404 = vpop.permute.xlu0 %403
    %405 = vrot.lane.b32.xlu0 %v386, 17
    %v406 = vpop.permute.xlu0 %405
    %407 = vrot.lane.b32.xlu0 %v388, 17
    %v408 = vpop.permute.xlu0 %407
    %v409 = vlaneseq
    %v410 = vand.u32 %v409, 127
    %vm411 = vcmp.lt.s32.totalorder %v410, 17
    %v412 = vsel %vm411, %v402, %v406
    %v413 = vsel %vm411, %v404, %v408
    %v414 = vsel %vm411, %v406, %v402
    %v415 = vsel %vm411, %v408, %v404
    %v416 = vld [vmem:[%s5] ss:$8 sm:$0x3]
    %v418 = vlaneseq
    %v419 = vshrl.u32 %v418, 7
    %v420 = vsub.s32 0, %v419
    %v421 = vrot.slane %v416, %v420
    %v422 = vlaneseq
    %v423 = vshrl.u32 %v422, 7
    %v424 = vsub.s32 1, %v423
    %v425 = vrot.slane %v416, %v424
    %v428 = vmul.f32 %v414, %v421
    %v429 = vmul.f32 %v412, %v425
    %v430 = vmul.f32 %v415, %v421
    %v431 = vmul.f32 %v413, %v425
    %432 = vset.pattern.permute.xlu0 4
    %433 = vperm.xlu0 %432, %v37
    %v434 = vpop.permute.xlu0 %433
    %436 = vset.pattern.permute.xlu0 4
    %437 = vperm.xlu0 %436, %v38
    %v438 = vpop.permute.xlu0 %437
    %v440 = vmul.f32 %v434, %v428
    %v441 = vmul.f32 %v434, %v429
    %v442 = vmul.f32 %v438, %v430
    %v443 = vmul.f32 %v438, %v431
    %v444 = vadd.f32 %v397, %v440
    %v445 = vadd.f32 %v398, %v441
    %v446 = vadd.f32 %v399, %v442
    %v447 = vadd.f32 %v400, %v443
    %448 = vrot.lane.b32.xlu0 %v385, 16
    %v449 = vpop.permute.xlu0 %448
    %450 = vrot.lane.b32.xlu0 %v387, 16
    %v451 = vpop.permute.xlu0 %450
    %452 = vrot.lane.b32.xlu0 %v386, 16
    %v453 = vpop.permute.xlu0 %452
    %454 = vrot.lane.b32.xlu0 %v388, 16
    %v455 = vpop.permute.xlu0 %454
    %vm456 = vcmp.lt.s32.totalorder %v410, 16
    %v457 = vsel %vm456, %v449, %v453
    %v458 = vsel %vm456, %v451, %v455
    %v459 = vsel %vm456, %v453, %v449
    %v460 = vsel %vm456, %v455, %v451
    %s461 = scalar_lea.vmem %s5, 1
    %v462 = vld [vmem:[%s461] ss:$8 sm:$0x3]
    %v464 = vlaneseq
    %v465 = vshrl.u32 %v464, 7
    %v466 = vsub.s32 0, %v465
    %v467 = vrot.slane %v462, %v466
    %v468 = vlaneseq
    %v469 = vshrl.u32 %v468, 7
    %v470 = vsub.s32 1, %v469
    %v471 = vrot.slane %v462, %v470
    %v474 = vmul.f32 %v459, %v467
    %v475 = vmul.f32 %v457, %v471
    %v476 = vmul.f32 %v460, %v467
    %v477 = vmul.f32 %v458, %v471
    %478 = vset.pattern.permute.xlu0 5
    %479 = vperm.xlu0 %478, %v37
    %v480 = vpop.permute.xlu0 %479
    %482 = vset.pattern.permute.xlu0 5
    %483 = vperm.xlu0 %482, %v38
    %v484 = vpop.permute.xlu0 %483
    %v486 = vmul.f32 %v480, %v474
    %v487 = vmul.f32 %v480, %v475
    %v488 = vmul.f32 %v484, %v476
    %v489 = vmul.f32 %v484, %v477
    %v490 = vadd.f32 %v444, %v486
    %v491 = vadd.f32 %v445, %v487
    %v492 = vadd.f32 %v446, %v488
    %v493 = vadd.f32 %v447, %v489
    %494 = vrot.lane.b32.xlu0 %v385, 15
    %v495 = vpop.permute.xlu0 %494
    %496 = vrot.lane.b32.xlu0 %v387, 15
    %v497 = vpop.permute.xlu0 %496
    %498 = vrot.lane.b32.xlu0 %v386, 15
    %v499 = vpop.permute.xlu0 %498
    %500 = vrot.lane.b32.xlu0 %v388, 15
    %v501 = vpop.permute.xlu0 %500
    %vm502 = vcmp.lt.s32.totalorder %v410, 15
    %v503 = vsel %vm502, %v495, %v499
    %v504 = vsel %vm502, %v497, %v501
    %v505 = vsel %vm502, %v499, %v495
    %v506 = vsel %vm502, %v501, %v497
    %s507 = scalar_lea.vmem %s5, 2
    %v508 = vld [vmem:[%s507] ss:$8 sm:$0x3]
    %v510 = vlaneseq
    %v511 = vshrl.u32 %v510, 7
    %v512 = vsub.s32 0, %v511
    %v513 = vrot.slane %v508, %v512
    %v514 = vlaneseq
    %v515 = vshrl.u32 %v514, 7
    %v516 = vsub.s32 1, %v515
    %v517 = vrot.slane %v508, %v516
    %v520 = vmul.f32 %v505, %v513
    %v521 = vmul.f32 %v503, %v517
    %v522 = vmul.f32 %v506, %v513
    %v523 = vmul.f32 %v504, %v517
    %524 = vset.pattern.permute.xlu0 6
    %525 = vperm.xlu0 %524, %v37
    %v526 = vpop.permute.xlu0 %525
    %528 = vset.pattern.permute.xlu0 6
    %529 = vperm.xlu0 %528, %v38
    %v530 = vpop.permute.xlu0 %529
    %v532 = vmul.f32 %v526, %v520
    %v533 = vmul.f32 %v526, %v521
    %v534 = vmul.f32 %v530, %v522
    %v535 = vmul.f32 %v530, %v523
    %v536 = vadd.f32 %v490, %v532
    %v537 = vadd.f32 %v491, %v533
    %v538 = vadd.f32 %v492, %v534
    %v539 = vadd.f32 %v493, %v535
    %540 = vrot.lane.b32.xlu0 %v385, 1
    %v541 = vpop.permute.xlu0 %540
    %542 = vrot.lane.b32.xlu0 %v387, 1
    %v543 = vpop.permute.xlu0 %542
    %544 = vrot.lane.b32.xlu0 %v386, 1
    %v545 = vpop.permute.xlu0 %544
    %546 = vrot.lane.b32.xlu0 %v388, 1
    %v547 = vpop.permute.xlu0 %546
    %vm548 = vcmp.lt.s32.totalorder %v410, 1
    %v549 = vsel %vm548, %v541, %v545
    %v550 = vsel %vm548, %v543, %v547
    %v551 = vsel %vm548, %v545, %v541
    %v552 = vsel %vm548, %v547, %v543
    %s553 = scalar_lea.vmem %s5, 3
    %v554 = vld [vmem:[%s553] ss:$8 sm:$0x3]
    %v556 = vlaneseq
    %v557 = vshrl.u32 %v556, 7
    %v558 = vsub.s32 0, %v557
    %v559 = vrot.slane %v554, %v558
    %v560 = vlaneseq
    %v561 = vshrl.u32 %v560, 7
    %v562 = vsub.s32 1, %v561
    %v563 = vrot.slane %v554, %v562
    %v566 = vmul.f32 %v551, %v559
    %v567 = vmul.f32 %v549, %v563
    %v568 = vmul.f32 %v552, %v559
    %v569 = vmul.f32 %v550, %v563
    %570 = vset.pattern.permute.xlu0 7
    %571 = vperm.xlu0 %570, %v37
    %v572 = vpop.permute.xlu0 %571
    %574 = vset.pattern.permute.xlu0 7
    %575 = vperm.xlu0 %574, %v38
    %v576 = vpop.permute.xlu0 %575
    %v578 = vmul.f32 %v572, %v566
    %v579 = vmul.f32 %v572, %v567
    %v580 = vmul.f32 %v576, %v568
    %v581 = vmul.f32 %v576, %v569
    %v582 = vadd.f32 %v536, %v578
    %v583 = vadd.f32 %v537, %v579
    %v584 = vadd.f32 %v538, %v580
    %v585 = vadd.f32 %v539, %v581
    %586 = vrot.lane.b32.xlu0 %v385, 127
    %v587 = vpop.permute.xlu0 %586
    %588 = vrot.lane.b32.xlu0 %v387, 127
    %v589 = vpop.permute.xlu0 %588
    %590 = vrot.lane.b32.xlu0 %v386, 127
    %v591 = vpop.permute.xlu0 %590
    %592 = vrot.lane.b32.xlu0 %v388, 127
    %v593 = vpop.permute.xlu0 %592
    %vm594 = vcmp.lt.s32.totalorder %v410, 127
    %v595 = vsel %vm594, %v587, %v591
    %v596 = vsel %vm594, %v589, %v593
    %v597 = vsel %vm594, %v591, %v587
    %v598 = vsel %vm594, %v593, %v589
    %s599 = scalar_lea.vmem %s5, 5
    %v600 = vld [vmem:[%s599] ss:$8 sm:$0x3]
    %v602 = vlaneseq
    %v603 = vshrl.u32 %v602, 7
    %v604 = vsub.s32 0, %v603
    %v605 = vrot.slane %v600, %v604
    %v606 = vlaneseq
    %v607 = vshrl.u32 %v606, 7
    %v608 = vsub.s32 1, %v607
    %v609 = vrot.slane %v600, %v608
    %v612 = vmul.f32 %v595, %v605
    %v613 = vmul.f32 %v597, %v609
    %v614 = vmul.f32 %v596, %v605
    %v615 = vmul.f32 %v598, %v609
    %616 = vset.pattern.permute.xlu0 9
    %617 = vperm.xlu0 %616, %v37
    %v618 = vpop.permute.xlu0 %617
    %620 = vset.pattern.permute.xlu0 9
    %621 = vperm.xlu0 %620, %v38
    %v622 = vpop.permute.xlu0 %621
    %v624 = vmul.f32 %v618, %v612
    %v625 = vmul.f32 %v618, %v613
    %v626 = vmul.f32 %v622, %v614
    %v627 = vmul.f32 %v622, %v615
    %v628 = vadd.f32 %v582, %v624
    %v629 = vadd.f32 %v583, %v625
    %v630 = vadd.f32 %v584, %v626
    %v631 = vadd.f32 %v585, %v627
    %632 = vrot.lane.b32.xlu0 %v385, 113
    %v633 = vpop.permute.xlu0 %632
    %634 = vrot.lane.b32.xlu0 %v387, 113
    %v635 = vpop.permute.xlu0 %634
    %636 = vrot.lane.b32.xlu0 %v386, 113
    %v637 = vpop.permute.xlu0 %636
    %638 = vrot.lane.b32.xlu0 %v388, 113
    %v639 = vpop.permute.xlu0 %638
    %vm640 = vcmp.lt.s32.totalorder %v410, 113
    %v641 = vsel %vm640, %v633, %v637
    %v642 = vsel %vm640, %v635, %v639
    %v643 = vsel %vm640, %v637, %v633
    %v644 = vsel %vm640, %v639, %v635
    %s645 = scalar_lea.vmem %s5, 6
    %v646 = vld [vmem:[%s645] ss:$8 sm:$0x3]
    %v648 = vlaneseq
    %v649 = vshrl.u32 %v648, 7
    %v650 = vsub.s32 0, %v649
    %v651 = vrot.slane %v646, %v650
    %v652 = vlaneseq
    %v653 = vshrl.u32 %v652, 7
    %v654 = vsub.s32 1, %v653
    %v655 = vrot.slane %v646, %v654
    %v658 = vmul.f32 %v641, %v651
    %v659 = vmul.f32 %v643, %v655
    %v660 = vmul.f32 %v642, %v651
    %v661 = vmul.f32 %v644, %v655
    %662 = vset.pattern.permute.xlu0 10
    %663 = vperm.xlu0 %662, %v37
    %v664 = vpop.permute.xlu0 %663
    %666 = vset.pattern.permute.xlu0 10
    %667 = vperm.xlu0 %666, %v38
    %v668 = vpop.permute.xlu0 %667
    %v670 = vmul.f32 %v664, %v658
    %v671 = vmul.f32 %v664, %v659
    %v672 = vmul.f32 %v668, %v660
    %v673 = vmul.f32 %v668, %v661
    %v674 = vadd.f32 %v628, %v670
    %v675 = vadd.f32 %v629, %v671
    %v676 = vadd.f32 %v630, %v672
    %v677 = vadd.f32 %v631, %v673
    %678 = vrot.lane.b32.xlu0 %v385, 112
    %v679 = vpop.permute.xlu0 %678
    %680 = vrot.lane.b32.xlu0 %v387, 112
    %v681 = vpop.permute.xlu0 %680
    %682 = vrot.lane.b32.xlu0 %v386, 112
    %v683 = vpop.permute.xlu0 %682
    %684 = vrot.lane.b32.xlu0 %v388, 112
    %v685 = vpop.permute.xlu0 %684
    %vm686 = vcmp.lt.s32.totalorder %v410, 112
    %v687 = vsel %vm686, %v679, %v683
    %v688 = vsel %vm686, %v681, %v685
    %v689 = vsel %vm686, %v683, %v679
    %v690 = vsel %vm686, %v685, %v681
    %s691 = scalar_lea.vmem %s5, 7
    %v692 = vld [vmem:[%s691] ss:$8 sm:$0x3]
    %v694 = vlaneseq
    %v695 = vshrl.u32 %v694, 7
    %v696 = vsub.s32 0, %v695
    %v697 = vrot.slane %v692, %v696
    %v698 = vlaneseq
    %v699 = vshrl.u32 %v698, 7
    %v700 = vsub.s32 1, %v699
    %v701 = vrot.slane %v692, %v700
    %v704 = vmul.f32 %v687, %v697
    %v705 = vmul.f32 %v689, %v701
    %v706 = vmul.f32 %v688, %v697
    %v707 = vmul.f32 %v690, %v701
    %708 = vset.pattern.permute.xlu0 11
    %709 = vperm.xlu0 %708, %v37
    %v710 = vpop.permute.xlu0 %709
    %712 = vset.pattern.permute.xlu0 11
    %713 = vperm.xlu0 %712, %v38
    %v714 = vpop.permute.xlu0 %713
    %v716 = vmul.f32 %v710, %v704
    %v717 = vmul.f32 %v710, %v705
    %v718 = vmul.f32 %v714, %v706
    %v719 = vmul.f32 %v714, %v707
    %v720 = vadd.f32 %v674, %v716
    %v721 = vadd.f32 %v675, %v717
    %v722 = vadd.f32 %v676, %v718
    %v723 = vadd.f32 %v677, %v719
    %724 = vrot.lane.b32.xlu0 %v385, 111
    %v725 = vpop.permute.xlu0 %724
    %726 = vrot.lane.b32.xlu0 %v387, 111
    %v727 = vpop.permute.xlu0 %726
    %728 = vrot.lane.b32.xlu0 %v386, 111
    %v729 = vpop.permute.xlu0 %728
    %730 = vrot.lane.b32.xlu0 %v388, 111
    %v731 = vpop.permute.xlu0 %730
    %vm732 = vcmp.lt.s32.totalorder %v410, 111
    %v733 = vsel %vm732, %v725, %v729
    %v734 = vsel %vm732, %v727, %v731
    %v735 = vsel %vm732, %v729, %v725
    %v736 = vsel %vm732, %v731, %v727
    %s737 = scalar_lea.vmem %s5, 16
    %v738 = vld [vmem:[%s737] ss:$8 sm:$0x3]
    %v740 = vlaneseq
    %v741 = vshrl.u32 %v740, 7
    %v742 = vsub.s32 0, %v741
    %v743 = vrot.slane %v738, %v742
    %v744 = vlaneseq
    %v745 = vshrl.u32 %v744, 7
    %v746 = vsub.s32 1, %v745
    %v747 = vrot.slane %v738, %v746
    %v750 = vmul.f32 %v733, %v743
    %v751 = vmul.f32 %v735, %v747
    %v752 = vmul.f32 %v734, %v743
    %v753 = vmul.f32 %v736, %v747
    %754 = vset.pattern.permute.xlu0 12
    %755 = vperm.xlu0 %754, %v37
    %v756 = vpop.permute.xlu0 %755
    %758 = vset.pattern.permute.xlu0 12
    %759 = vperm.xlu0 %758, %v38
    %v760 = vpop.permute.xlu0 %759
    %v762 = vmul.f32 %v756, %v750
    %v763 = vmul.f32 %v756, %v751
    %v764 = vmul.f32 %v760, %v752
    %v765 = vmul.f32 %v760, %v753
    %v766 = vadd.f32 %v720, %v762
    %v767 = vadd.f32 %v721, %v763
    %v768 = vadd.f32 %v722, %v764
    %v769 = vadd.f32 %v723, %v765
    %v770 = vld [vmem:[%s0] sm:$0xff]
    %v771 = vld [vmem:[%s0 + $0x8] sm:$0xff]
    %772 = vset.pattern.permute.xlu0 3
    %773 = vperm.xlu0 %772, %v37
    %v774 = vpop.permute.xlu0 %773
    %v776 = vadd.f32 %v770, %v774
    %v777 = vadd.f32 %v771, %v774
    %v778 = vadd.f32 %v776, %v766
    %v779 = vadd.f32 %v777, %v767
    %v780 = vadd.f32 %v778, %v768
    %v781 = vadd.f32 %v779, %v769
    %v782 = vmul.f32 %v780, 0.5
    %v783 = vmul.f32 %v781, 0.5
    %v784 = vmul.f32 %v780, 0.70710677
    %v785 = vmul.f32 %v781, 0.70710677
    %v786 = verf.f32.pop %v784
    %v787 = verf.f32.pop %v785
    %v788 = vadd.f32 %v786, 1.0
    %v789 = vadd.f32 %v787, 1.0
    %v790 = vmul.f32 %v782, %v788
    %v791 = vmul.f32 %v783, %v789
    %792 = vst [vmem:[%s6] sm:$0xff] %v790
    %793 = vst [vmem:[%s6 + $0x8] sm:$0xff] %v791
    // Predicated region
    $region30: #{apply.1} parent=1 // pred_check
      _
    $region31: #{apply.1} parent=1 // pred_check_branch
      %795 = sbr.rel (0) target = $region33
    $region32: #{apply.1} parent=1 // pred_region
      _
    $region33: #{apply.1} parent=1 // pred_fallthru
      _
    // Predicated region
    $region34: #{apply.1} parent=1 // pred_check
      _
    $region35: #{apply.1} parent=1 // pred_check_branch
      %797 = sbr.rel (0) target = $region37
    $region36: #{apply.1} parent=1 // pred_region
      _
    $region37: #{apply.1} parent=1 // pred_fallthru
      _
    %798 = vsyncpa [#allocation3], 1

</llo_original>
